<compile_context>
chip_gen: v5e
topology: v5e:2x2
jax: 0.10.0
libtpu: 0.0.40
codegen_flags: <defaults>
</compile_context>

<pallas_src>
import jax
import jax.numpy as jnp
from jax.experimental import pallas as pl
from jax.experimental.pallas import tpu as pltpu


def _einsum_gather_kernel(ind_ref, x_ref, w_ref, o_ref):
    """One grid point = (expert e, row-block m).

    ind_ref : VMEM [1, bm, 1] int32  — flattened (b*T + t) row indices
    x_ref   : VMEM [B*T, I]   bf16   — full flattened X (constant block, resident)
    w_ref   : VMEM [1, I, J]  bf16   — W[e]
    o_ref   : VMEM [1, bm, J] f32    — output rows (row r = b*K + k within block)
    """
    bm = o_ref.shape[1]
    bt = x_ref.shape[0]

    idx = ind_ref[0]                                             # (bm, 1) int32
    # Vectorized gather via one-hot matmul on the MXU (0/1 exact in bf16).
    col = jax.lax.broadcasted_iota(jnp.int32, (bm, bt), 1)       # row-of-X index
    onehot = (col == idx).astype(x_ref.dtype)                    # (bm, BT) bf16
    xg = jnp.dot(onehot, x_ref[...],
                 preferred_element_type=jnp.float32)             # (bm, I) gathered rows

    # Hot path: (bm, I) @ (I, J) on the MXU, f32 accumulation.
    out = jnp.dot(xg.astype(w_ref.dtype), w_ref[0],
                  preferred_element_type=jnp.float32)            # (bm, J)
    o_ref[0] = out.astype(o_ref.dtype)


def einsum_gather(X, W, ind):
    """X: [B, T, I] f32, W: [E, I, J] f32, ind: [B, E, K] int32 -> [B, E, K, J] f32."""
    B, T, I = X.shape
    E, _, J = W.shape
    _, _, K = ind.shape
    BK = B * K
    BT = B * T

    # Row-block size over the gathered-row axis (sublane-aligned, caps the
    # per-step one-hot at bm x BT).
    bm = 256 if BK >= 256 else ((BK + 7) // 8) * 8
    BK_pad = ((BK + bm - 1) // bm) * bm

    # bf16 compute inputs (MXU-native); master copies stay f32 outside the kernel.
    X2 = X.astype(jnp.bfloat16).reshape(BT, I)            # flattened over (B, T)
    Wb = W.astype(jnp.bfloat16)

    # Per-expert flattened row indices into X2: flat[e, b*K + k] = b*T + ind[b,e,k].
    # Clip guards against out-of-range indices (no runtime VMEM bounds check on TPU).
    safe = jnp.clip(ind, 0, T - 1).astype(jnp.int32)                      # (B, E, K)
    flat = safe + (jnp.arange(B, dtype=jnp.int32) * T)[:, None, None]     # (B, E, K)
    flat = jnp.transpose(flat, (1, 0, 2)).reshape(E, BK, 1)               # (E, BK, 1)
    if BK_pad != BK:
        # Pad rows use index 0 (valid); their outputs are dropped below.
        flat = jnp.pad(flat, ((0, 0), (0, BK_pad - BK), (0, 0)))

    grid_spec = pltpu.PrefetchScalarGridSpec(
        num_scalar_prefetch=0,
        grid=(E, BK_pad // bm),
        in_specs=[
            pl.BlockSpec((1, bm, 1), lambda e, m: (e, m, 0)),   # indices for (e, block m)
            pl.BlockSpec((BT, I), lambda e, m: (0, 0)),         # full X, resident
            pl.BlockSpec((1, I, J), lambda e, m: (e, 0, 0)),    # W[e]
        ],
        out_specs=pl.BlockSpec((1, bm, J), lambda e, m: (e, m, 0)),
    )

    out = pl.pallas_call(
        _einsum_gather_kernel,
        out_shape=jax.ShapeDtypeStruct((E, BK_pad, J), jnp.float32),
        grid_spec=grid_spec,
        compiler_params=pltpu.CompilerParams(
            # Both axes independent -> megacore sharding on v7x.
            dimension_semantics=("parallel", "parallel")
        ),
    )(flat, X2, Wb)

    # (E, BK_pad, J) -> (B, E, K, J)  (drop pad rows; layout plumbing only)
    return out[:, :BK, :].reshape(E, B, K, J).transpose(1, 0, 2, 3)


if __name__ == "__main__":
    # Small shapes consistent with the module's forward.
    B, T, I, J, E, K = 2, 16, 32, 32, 4, 8

    key = jax.random.PRNGKey(0)
    k_w, k_x, k_i = jax.random.split(key, 3)

    # Deterministic inputs; W matches torch.rand(E, I, J) (uniform [0, 1)).
    W = jax.random.uniform(k_w, (E, I, J), dtype=jnp.float32)
    X = jax.random.normal(k_x, (B, T, I), dtype=jnp.float32)
    ind = jax.random.randint(k_i, (B, E, K), 0, T, dtype=jnp.int32)

    out = jax.block_until_ready(einsum_gather(X, W, ind))
    assert out.shape == (B, E, K, J)

    # Pure-JAX reference mirroring the PyTorch forward, using the same bf16
    # input rounding the kernel applies (kernel accumulates in f32 on the MXU).
    Xb = X.astype(jnp.bfloat16).astype(jnp.float32)
    Wb = W.astype(jnp.bfloat16).astype(jnp.float32)
    Y = jnp.einsum("bti,eij->betj", Xb, Wb)
    ref = jnp.take_along_axis(
        Y, jnp.broadcast_to(ind[..., None], (B, E, K, J)), axis=2
    )
    assert jnp.allclose(out, ref, atol=1e-2, rtol=1e-2), float(
        jnp.max(jnp.abs(out - ref))
    )

    print("KERNEL_OK")
</pallas_src>

<mosaic_0001>
module attributes {stable_mosaic.version = 11 : i64} {
  func.func @_einsum_gather_kernel(%arg0: i32, %arg1: i32, %arg2: memref<1x16x1xi32, #tpu.memory_space<vmem>>, %arg3: memref<32x32xbf16, #tpu.memory_space<vmem>>, %arg4: memref<1x32x32xbf16, #tpu.memory_space<vmem>>, %arg5: memref<1x16x32xf32, #tpu.memory_space<vmem>>) attributes {dimension_semantics = [#tpu.dimension_semantics<parallel>, #tpu.dimension_semantics<parallel>], iteration_bounds = array<i64: 4, 1>, scalar_prefetch = 0 : i64, scratch_operands = 0 : i64, tpu.core_type = #tpu.core_type<tc>, window_params = [{transform_indices = @transform_0, window_bounds = array<i64: 1, 16, 1>}, {pipeline_mode = #tpu.pipeline_mode<synchronous>, transform_indices = @transform_1, window_bounds = array<i64: 32, 32>}, {transform_indices = @transform_2, window_bounds = array<i64: 1, 32, 32>}, {transform_indices = @transform_3, window_bounds = array<i64: 1, 16, 32>}]} {
    %c0 = arith.constant 0 : index
    %c0_0 = arith.constant 0 : index
    %c0_1 = arith.constant 0 : index
    %0 = vector.load %arg2[%c0, %c0_0, %c0_1] : memref<1x16x1xi32, #tpu.memory_space<vmem>>, vector<1x16x1xi32>
    %1 = vector.shape_cast %0 : vector<1x16x1xi32> to vector<16x1xi32>
    %2 = tpu.iota {dimensions = array<i32: 1>} : vector<16x32xi32>
    %3 = vector.broadcast %1 : vector<16x1xi32> to vector<16x32xi32>
    %4 = arith.cmpi eq, %2, %3 : vector<16x32xi32>
    %5 = arith.extui %4 : vector<16x32xi1> to vector<16x32xi32>
    %6 = arith.sitofp %5 : vector<16x32xi32> to vector<16x32xf32>
    %7 = arith.truncf %6 : vector<16x32xf32> to vector<16x32xbf16>
    %c0_2 = arith.constant 0 : index
    %c0_3 = arith.constant 0 : index
    %8 = vector.load %arg3[%c0_2, %c0_3] : memref<32x32xbf16, #tpu.memory_space<vmem>>, vector<32x32xbf16>
    %cst = arith.constant dense<0.000000e+00> : vector<16x32xf32>
    %9 = tpu.matmul %7, %8, %cst {dimension_numbers = #tpu.dot_dimension_numbers<[1], [0], [0], [1], [0, 0, 1, 1], [], []>} : vector<16x32xbf16>, vector<32x32xbf16>, vector<16x32xf32> -> vector<16x32xf32>
    %10 = arith.truncf %9 : vector<16x32xf32> to vector<16x32xbf16>
    %c0_4 = arith.constant 0 : index
    %c0_5 = arith.constant 0 : index
    %c0_6 = arith.constant 0 : index
    %11 = vector.load %arg4[%c0_4, %c0_5, %c0_6] : memref<1x32x32xbf16, #tpu.memory_space<vmem>>, vector<1x32x32xbf16>
    %12 = vector.shape_cast %11 : vector<1x32x32xbf16> to vector<32x32xbf16>
    %cst_7 = arith.constant dense<0.000000e+00> : vector<16x32xf32>
    %13 = tpu.matmul %10, %12, %cst_7 {dimension_numbers = #tpu.dot_dimension_numbers<[1], [0], [0], [1], [0, 0, 1, 1], [], []>} : vector<16x32xbf16>, vector<32x32xbf16>, vector<16x32xf32> -> vector<16x32xf32>
    %c0_8 = arith.constant 0 : index
    %c0_9 = arith.constant 0 : index
    %c0_10 = arith.constant 0 : index
    %14 = vector.load %arg5[%c0_8, %c0_9, %c0_10] : memref<1x16x32xf32, #tpu.memory_space<vmem>>, vector<1x16x32xf32>
    %15 = vector.shape_cast %14 : vector<1x16x32xf32> to vector<16x32xf32>
    %16 = vector.shape_cast %13 : vector<16x32xf32> to vector<1x16x32xf32>
    tpu.vector_store %arg5[%c0_8, %c0_9, %c0_10], %16 {strides = array<i32>} : memref<1x16x32xf32, #tpu.memory_space<vmem>>, vector<1x16x32xf32>,
    return
  }
  func.func @transform_0(%arg0: i32, %arg1: i32) -> (i32, i32, i32) {
    %c0_i32 = arith.constant 0 : i32
    %c0_i32_0 = arith.constant 0 : i32
    return %arg0, %arg1, %c0_i32 : i32, i32, i32
  }
  func.func @transform_1(%arg0: i32, %arg1: i32) -> (i32, i32) {
    %c0_i32 = arith.constant 0 : i32
    %c0_i32_0 = arith.constant 0 : i32
    %c0_i32_1 = arith.constant 0 : i32
    return %c0_i32, %c0_i32_0 : i32, i32
  }
  func.func @transform_2(%arg0: i32, %arg1: i32) -> (i32, i32, i32) {
    %c0_i32 = arith.constant 0 : i32
    %c0_i32_0 = arith.constant 0 : i32
    %c0_i32_1 = arith.constant 0 : i32
    return %arg0, %c0_i32, %c0_i32_0 : i32, i32, i32
  }
  func.func @transform_3(%arg0: i32, %arg1: i32) -> (i32, i32, i32) {
    %c0_i32 = arith.constant 0 : i32
    %c0_i32_0 = arith.constant 0 : i32
    return %arg0, %arg1, %c0_i32 : i32, i32, i32
  }
}

</mosaic_0001>

<llo_original>
// kernel: tpu_custom_call.1
$region0: #{tpu_custom_call.1}
  #allocation0 [shape = 'u32[]', space=smem, size = 0x4, offset = 0x4, fixed_abs, tag = 'smem constant byte address 0x4 - core index']
  #allocation1 [shape = 'u32[72,128]{1,0:T(1,128)}', space=vmem, size = 0x9000, scoped, tag = 'internal scratch']
  %s0 = inlined_call_operand.vmem [shape: s32[4,16,1], index: 0, kind: input, shape index: {}]
  %s1 = inlined_call_operand.hbm [shape: bf16[32,32], index: 1, kind: input, shape index: {}]
  %s2 = inlined_call_operand.vmem [shape: bf16[4,32,32], index: 2, kind: input, shape index: {}]
  %s3 = inlined_call_operand.hbm [shape: f32[4,16,32], index: 3, kind: output, shape index: {}]
  %s4 = sld [smem:[#allocation0]]
  $region49: #{tpu_custom_call.1} parent=0
    _
  %s6 = ssub.s32 1, %s4
  %s7 = scalar_select 0, %s6, %s4
  $region1: #{tpu_custom_call.1} parent=0
    #allocation2 [shape = 'u8[8192]{0}', space=vmem, size = 0x2000, scoped, tag = 'input window, operand 1, single buffered']
    #allocation3 [shape = 's32[2]{0}', space=sflag, size = 0x8, scoped, tag = 'scoped memory for tpu_custom_call.1']
    #allocation4 [shape = 's32[2]{0}', space=sflag, size = 0x8, scoped, tag = 'scoped memory for tpu_custom_call.1']
    #allocation5 [shape = 'u8[16384]{0}', space=vmem, size = 0x4000, scoped, tag = 'output window, operand 0']
    %8 = vsyncpa [#allocation3], 0
    %9 = vsyncpa [#allocation4], 0
    %s10 = scalar_lea.sflag [#allocation4], 1
    %11 = vsyncpa %s10, 0
    loop: start=0, step=1, limit=6
    $region2: #{tpu_custom_call.1} parent=1 // loop_pre_header
      _
    $region3: #{tpu_custom_call.1} parent=1 // loop_header
      %s13 = sphi 0, %s17
      %p14 = scmp.ge.s32.totalorder %s13, 6
      %s20 = sphi 0, %s32
      %s21 = sphi 0, %s28
      %s22 = sphi 0, %s20
      %s23 = sphi 0, %s21
      %s24 = sphi 0, %s22
      %s25 = sphi 0, %s23
      %s37 = sphi 0, %s39
      %s40 = sphi 0, %s37
      %s41 = sphi 0, %s40
      %s57 = sphi 0, %s41
      %s61 = sphi 0, %s61
      %s63 = sphi 0, %s61
      %s64 = sphi 0, %s63
      %s78 = sphi 0, %s64
      %s84 = sphi 0, %s86
      %s87 = sphi 0, %s84
      %s88 = sphi 0, %s87
      %s104 = sphi 0, %s88
      %s112 = sphi 0, %s114
      %s115 = sphi 0, %s112
      %s116 = sphi 0, %s115
      %s132 = sphi 0, %s116
    $region4: #{tpu_custom_call.1} parent=1 // loop_header_branch
      %16 = sbr.rel (%p14) target = $region8
    $region5: #{tpu_custom_call.1} parent=1 // loop_body
      %s18 = ssub.s32 %s13, 1
      %s19 = ssub.s32 %s13, 2
      %s26 = sadd.s32 1, %s21
      %p27 = scmp.ge.s32.totalorder %s26, 1
      %s28 = scalar_select %p27, 0, %s26
      %s29 = sadd.s32 1, %s20
      %s30 = scalar_select %p27, %s29, %s20
      %p31 = scmp.ge.s32.totalorder %s30, 4
      %s32 = scalar_select %p31, 0, %s30
      %s33 = ssub.s32 %s20, %s32
      %s34 = ssub.s32 %s21, %s28
      %s35 = sor.u32 %s33, %s34
      %p36 = scmp.eq.s32.totalorder %s35, 0
      %s38 = sadd.s32 %s37, 1
      %s39 = scalar_select %p36, %s37, %s38
      %p42 = pneg %p36
      %p43 = scmp.eq.s32.totalorder %s13, 3
      %p44 = por %p42, %p43
      %p45 = scmp.ne.s32.totalorder %s37, %s40
      %p46 = scmp.eq.s32.totalorder %s13, 0
      %p47 = por %p45, %p46
      %p48 = scmp.ne.s32.totalorder %s37, %s40
      %p49 = scmp.eq.s32.totalorder %s18, 3
      %p50 = por %p48, %p49
      %p51 = scmp.ne.s32.totalorder %s40, %s41
      %p52 = scmp.eq.s32.totalorder %s18, 0
      %p53 = por %p51, %p52
      %p54 = scmp.ne.s32.totalorder %s40, %s41
      %p55 = scmp.eq.s32.totalorder %s19, 3
      %p56 = por %p54, %p55
      %p58 = scmp.ne.s32.totalorder %s41, %s57
      %p59 = scmp.eq.s32.totalorder %s19, 0
      %p60 = por %p58, %p59
      %s62 = sadd.s32 %s61, 1
      %p65 = scmp.eq.s32.totalorder %s13, 3
      %p66 = scmp.ne.s32.totalorder %s61, %s63
      %p67 = scmp.eq.s32.totalorder %s13, 0
      %p68 = por %p66, %p67
      %p69 = scmp.ne.s32.totalorder %s61, %s63
      %p70 = scmp.eq.s32.totalorder %s18, 3
      %p71 = por %p69, %p70
      %p72 = scmp.ne.s32.totalorder %s63, %s64
      %p73 = scmp.eq.s32.totalorder %s18, 0
      %p74 = por %p72, %p73
      %p75 = scmp.ne.s32.totalorder %s63, %s64
      %p76 = scmp.eq.s32.totalorder %s19, 3
      %p77 = por %p75, %p76
      %p79 = scmp.ne.s32.totalorder %s64, %s78
      %p80 = scmp.eq.s32.totalorder %s19, 0
      %p81 = por %p79, %p80
      %s82 = ssub.s32 %s20, %s32
      %p83 = scmp.eq.s32.totalorder %s82, 0
      %s85 = sadd.s32 %s84, 1
      %s86 = scalar_select %p83, %s84, %s85
      %p89 = pneg %p83
      %p90 = scmp.eq.s32.totalorder %s13, 3
      %p91 = por %p89, %p90
      %p92 = scmp.ne.s32.totalorder %s84, %s87
      %p93 = scmp.eq.s32.totalorder %s13, 0
      %p94 = por %p92, %p93
      %p95 = scmp.ne.s32.totalorder %s84, %s87
      %p96 = scmp.eq.s32.totalorder %s18, 3
      %p97 = por %p95, %p96
      %p98 = scmp.ne.s32.totalorder %s87, %s88
      %p99 = scmp.eq.s32.totalorder %s18, 0
      %p100 = por %p98, %p99
      %p101 = scmp.ne.s32.totalorder %s87, %s88
      %p102 = scmp.eq.s32.totalorder %s19, 3
      %p103 = por %p101, %p102
      %p105 = scmp.ne.s32.totalorder %s88, %s104
      %p106 = scmp.eq.s32.totalorder %s19, 0
      %p107 = por %p105, %p106
      %s108 = ssub.s32 %s20, %s32
      %s109 = ssub.s32 %s21, %s28
      %s110 = sor.u32 %s108, %s109
      %p111 = scmp.eq.s32.totalorder %s110, 0
      %s113 = sadd.s32 %s112, 1
      %s114 = scalar_select %p111, %s112, %s113
      %p117 = pneg %p111
      %p118 = scmp.eq.s32.totalorder %s13, 3
      %p119 = por %p117, %p118
      %p120 = scmp.ne.s32.totalorder %s112, %s115
      %p121 = scmp.eq.s32.totalorder %s13, 0
      %p122 = por %p120, %p121
      %p123 = scmp.ne.s32.totalorder %s112, %s115
      %p124 = scmp.eq.s32.totalorder %s18, 3
      %p125 = por %p123, %p124
      %p126 = scmp.ne.s32.totalorder %s115, %s116
      %p127 = scmp.eq.s32.totalorder %s18, 0
      %p128 = por %p126, %p127
      %p129 = scmp.ne.s32.totalorder %s115, %s116
      %p130 = scmp.eq.s32.totalorder %s19, 3
      %p131 = por %p129, %p130
      %p133 = scmp.ne.s32.totalorder %s116, %s132
      %p134 = scmp.eq.s32.totalorder %s19, 0
      %p135 = por %p133, %p134
      %p136 = scmp.le.s32.totalorder 1, %s13
      %p137 = scmp.lt.s32.totalorder %s13, 5
      %p138 = pnand %p136, %p137
      %p139 = pneg %p138
      // Predicated region
      $region9: #{tpu_custom_call.1} parent=5 // pred_check
        _
      $region10: #{tpu_custom_call.1} parent=5 // pred_check_branch
        %141 = sbr.rel (%p138) target = $region12
      $region11: #{tpu_custom_call.1} parent=5 // pred_region
        %s142 = ssub.s32 %s13, 1
        // Predicated region
        $region13: #{tpu_custom_call.1} parent=11 // pred_check
          %p143 = pneg %p74
        $region14: #{tpu_custom_call.1} parent=11 // pred_check_branch
          %145 = sbr.rel (%p143) target = $region16
        $region15: #{tpu_custom_call.1} parent=11 // pred_region
          %147 = vsyncadd [#allocation3], 0
          %s148 = sshll.u32 %s1, 4
          %s149 = int_to_ptr.hbm [resolvable:$true] %s148
          %s150 = sshll.u32 [#allocation2], 4
          %s151 = int_to_ptr.vmem [resolvable:$true] %s150
          %156 = dma.hbm_to_vmem [thread:$0]  %s149, 256, %s151, [#allocation3], 64, 64, 4
        $region16: #{tpu_custom_call.1} parent=11 // pred_fallthru
          _
      $region12: #{tpu_custom_call.1} parent=5 // pred_fallthru
        _
      %p157 = scmp.lt.s32.totalorder %s13, 4
      // Predicated region
      $region17: #{tpu_custom_call.1} parent=5 // pred_check
        %p158 = pneg %p157
      $region18: #{tpu_custom_call.1} parent=5 // pred_check_branch
        %160 = sbr.rel (%p158) target = $region20
      $region19: #{tpu_custom_call.1} parent=5 // pred_region
        // Predicated region
        $region21: #{tpu_custom_call.1} parent=19 // pred_check
          %p161 = pneg %p47
        $region22: #{tpu_custom_call.1} parent=19 // pred_check_branch
          %163 = sbr.rel (%p161) target = $region24
        $region23: #{tpu_custom_call.1} parent=19 // pred_region
          %s164 = smul.u32 2, %s21
          %p165 = scmp.lt.s32.totalorder %s20, 3
          %s166 = scalar_select %p165, %s20, 3
          %p167 = scmp.lt.s32.totalorder %s164, 1
          %s168 = scalar_select %p167, %s164, 1
          %s169 = smul.addr %s166, 2
          %s170 = sadd.s32 %s168, %s169
          %s171 = smul.addr %s170, 8
          %s172 = scalar_lea.vmem %s0, %s171
          %s173 = smul.u32 2, %s21
        $region24: #{tpu_custom_call.1} parent=19 // pred_fallthru
          _
        // Predicated region
        $region25: #{tpu_custom_call.1} parent=19 // pred_check
          %p174 = pneg %p94
        $region26: #{tpu_custom_call.1} parent=19 // pred_check_branch
          %176 = sbr.rel (%p174) target = $region28
        $region27: #{tpu_custom_call.1} parent=19 // pred_region
          %p177 = scmp.lt.s32.totalorder %s20, 3
          %s178 = scalar_select %p177, %s20, 3
          %s179 = smul.addr %s178, 4
          %s180 = smul.addr %s179, 4
          %s181 = scalar_lea.vmem %s2, %s180
        $region28: #{tpu_custom_call.1} parent=19 // pred_fallthru
          _
      $region20: #{tpu_custom_call.1} parent=5 // pred_fallthru
        _
      %p182 = scmp.le.s32.totalorder 1, %s13
      %p183 = scmp.lt.s32.totalorder %s13, 5
      %p184 = pnand %p182, %p183
      %p185 = pneg %p184
      // Predicated region
      $region29: #{tpu_custom_call.1} parent=5 // pred_check
        _
      $region30: #{tpu_custom_call.1} parent=5 // pred_check_branch
        %187 = sbr.rel (%p184) target = $region32
      $region31: #{tpu_custom_call.1} parent=5 // pred_region
        %s188 = ssub.s32 %s13, 1
        // Predicated region
        $region33: #{tpu_custom_call.1} parent=31 // pred_check
          %p189 = pneg %p74
        $region34: #{tpu_custom_call.1} parent=31 // pred_check_branch
          %191 = sbr.rel (%p189) target = $region36
        $region35: #{tpu_custom_call.1} parent=31 // pred_region
          %193 = dma.done [#allocation3], 256
        $region36: #{tpu_custom_call.1} parent=31 // pred_fallthru
          _
        %s194 = smul.u32 2, %s23
        %p195 = scmp.lt.s32.totalorder %s22, 3
        %s196 = scalar_select %p195, %s22, 3
        %p197 = scmp.lt.s32.totalorder %s194, 1
        %s198 = scalar_select %p197, %s194, 1
        %s199 = smul.addr %s196, 2
        %s200 = sadd.s32 %s198, %s199
        %s201 = smul.addr %s200, 8
        %s202 = scalar_lea.vmem %s0, %s201
        %p203 = pneg %p53
        %p204 = pneg %p50
        %p205 = pneg %p74
        %p206 = pneg %p71
        %p207 = scmp.lt.s32.totalorder %s22, 3
        %s208 = scalar_select %p207, %s22, 3
        %s209 = smul.addr %s208, 4
        %s210 = smul.addr %s209, 4
        %s211 = scalar_lea.vmem %s2, %s210
        %p212 = pneg %p100
        %p213 = pneg %p97
        %p214 = pneg %p128
        %p215 = pneg %p125
        %s216 = sand.u32 %s115, 1
        %s217 = scalar_lea.sflag [#allocation4], %s216
        %s218 = sand.u32 %s115, 1
        %s219 = smul.addr %s218, 16
        %s220 = scalar_lea.vmem [#allocation5], %s219
        %s221 = smul.u32 2, %s23
        %p222 = scmp.lt.s32.totalorder %s22, 3
        %s223 = scalar_select %p222, %s22, 3
        %p224 = scmp.lt.s32.totalorder %s221, 1
        %s225 = scalar_select %p224, %s221, 1
        %s226 = smul.addr %s223, 2
        %s227 = sadd.s32 %s225, %s226
        %s228 = smul.addr %s227, 8
        %s229 = scalar_lea.vmem %s0, %s228
        %s230 = smul.u32 2, %s23
        %p231 = scmp.lt.s32.totalorder %s22, 3
        %s232 = scalar_select %p231, %s22, 3
        %s233 = smul.addr %s232, 4
        %s234 = smul.addr %s233, 4
        %s235 = scalar_lea.vmem %s2, %s234
        %s236 = smul.u32 2, %s23
        %v238 = vld [vmem:[%s229] sm:$0xff]
        %v239 = vld [vmem:[%s229 + $0x8] sm:$0xff]
        %v240 = vlaneseq
        %v241 = vand.u32 %v240, 127
        %242 = vset.pattern.permute.xlu0 0
        %243 = vperm.xlu0 %242, %v238
        %v244 = vpop.permute.xlu0 %243
        %245 = vset.pattern.permute.xlu0 0
        %246 = vperm.xlu0 %245, %v239
        %v247 = vpop.permute.xlu0 %246
        %vm248 = vcmp.eq.s32.totalorder %v241, %v244
        %vm249 = vcmp.eq.s32.totalorder %v241, %v247
        %v250 = vsel %vm248, 1, 0
        %v251 = vsel %vm249, 1, 0
        %v252 = vcvt.s32.f32 %v250
        %v253 = vcvt.s32.f32 %v251
        %v254 = vpack.c.bf16 %v253, %v252
        %v255 = vld [vmem:[#allocation2] sm:$0xf]
        %v256 = vld [vmem:[#allocation2 + $0x4] sm:$0xf]
        %v257 = vld [vmem:[#allocation2 + $0x8] sm:$0xf]
        %v258 = vld [vmem:[#allocation2 + $0xc] sm:$0xf]
        %v263 = vunpack.c.l.b16 %v255
        %v264 = vunpack.c.l.b16 %v256
        %v265 = vunpack.c.l.b16 %v257
        %v266 = vunpack.c.l.b16 %v258
        %v267 = vpack.c.b16 %v264, %v263
        %v268 = vpack.c.b16 %v266, %v265
        %vm271 = vcmask 261120
        %v273 = vsel %vm271, %v254, 0
        %275 = vmatpush.bf16.msra.mxu0 0
        %276 = vmatpush.bf16.msra.mxu0 0
        %277 = vmatpush.bf16.msra.mxu0 0
        %278 = vmatpush.bf16.msra.mxu0 0
        %279 = vmatpush.bf16.msra.mxu0 0
        %280 = vmatpush.bf16.msra.mxu0 0
        %281 = vmatpush.bf16.msra.mxu0 %v268
        %282 = vmatpush.bf16.msra.mxu0 %v267
        %283 = vmatmul.bf16.gmra.mxu0 %v273
        %v284 = vpop.f32.mrf.mxu0
        %v285 = vadd.f32 0.0, %v284
        %v286 = vpop.f32.mrf.mxu0
        %v287 = vadd.f32 0.0, %v286
        %288 = vdwg.mxu0
        %v289 = vpack.c.bf16 %v287, %v285
        %v290 = vld [vmem:[%s235] sm:$0xf]
        %v291 = vld [vmem:[%s235 + $0x4] sm:$0xf]
        %v292 = vld [vmem:[%s235 + $0x8] sm:$0xf]
        %v293 = vld [vmem:[%s235 + $0xc] sm:$0xf]
        %v298 = vunpack.c.l.b16 %v290
        %v299 = vunpack.c.l.b16 %v291
        %v300 = vunpack.c.l.b16 %v292
        %v301 = vunpack.c.l.b16 %v293
        %v302 = vpack.c.b16 %v299, %v298
        %v303 = vpack.c.b16 %v301, %v300
        %v307 = vsel %vm271, %v289, 0
        %309 = vmatpush.bf16.msra.mxu0 0
        %310 = vmatpush.bf16.msra.mxu0 0
        %311 = vmatpush.bf16.msra.mxu0 0
        %312 = vmatpush.bf16.msra.mxu0 0
        %313 = vmatpush.bf16.msra.mxu0 0
        %314 = vmatpush.bf16.msra.mxu0 0
        %315 = vmatpush.bf16.msra.mxu0 %v303
        %316 = vmatpush.bf16.msra.mxu0 %v302
        %317 = vmatmul.bf16.gmra.mxu0 %v307
        %v318 = vpop.f32.mrf.mxu0
        %v319 = vadd.f32 0.0, %v318
        %v320 = vpop.f32.mrf.mxu0
        %v321 = vadd.f32 0.0, %v320
        %322 = vdwg.mxu0
        %323 = vst.msk [vmem:[%s220] sm:$0xff] %vm271, %v319
        %324 = vst.msk [vmem:[%s220 + $0x8] sm:$0xff] %vm271, %v321
        %s325 = sand.u32 %s115, 1
        %s326 = scalar_lea.sflag [#allocation4], %s325
        %s327 = sand.u32 %s115, 1
        %s328 = smul.addr %s327, 16
        %s329 = scalar_lea.vmem [#allocation5], %s328
        // Predicated region
        $region37: #{tpu_custom_call.1} parent=31 // pred_check
          %p330 = pneg %p125
        $region38: #{tpu_custom_call.1} parent=31 // pred_check_branch
          %332 = sbr.rel (%p330) target = $region40
        $region39: #{tpu_custom_call.1} parent=31 // pred_region
          %s333 = smul.u32 2, %s23
          %335 = vsyncadd %s326, 0
          %s336 = smul.addr %s22, 2
          %s337 = sadd.s32 %s333, %s336
          %s338 = smul.addr %s337, 8
          %s339 = scalar_lea.hbm %s3, %s338
          %s340 = sshll.u32 %s329, 4
          %s341 = int_to_ptr.vmem [resolvable:$true] %s340
          %s342 = sshll.u32 %s339, 4
          %s343 = int_to_ptr.hbm [resolvable:$true] %s342
          %348 = dma.vmem_to_hbm [thread:$0]  %s341, 256, %s343, %s326, 128, 128, 8
        $region40: #{tpu_custom_call.1} parent=31 // pred_fallthru
          _
      $region32: #{tpu_custom_call.1} parent=5 // pred_fallthru
        _
      %p349 = scmp.le.s32.totalorder 2, %s13
      // Predicated region
      $region41: #{tpu_custom_call.1} parent=5 // pred_check
        %p350 = pneg %p349
      $region42: #{tpu_custom_call.1} parent=5 // pred_check_branch
        %352 = sbr.rel (%p350) target = $region44
      $region43: #{tpu_custom_call.1} parent=5 // pred_region
        %s353 = ssub.s32 %s13, 2
        // Predicated region
        $region45: #{tpu_custom_call.1} parent=43 // pred_check
          %p354 = pneg %p131
        $region46: #{tpu_custom_call.1} parent=43 // pred_check_branch
          %356 = sbr.rel (%p354) target = $region48
        $region47: #{tpu_custom_call.1} parent=43 // pred_region
          %s357 = sand.u32 %s116, 1
          %s358 = scalar_lea.sflag [#allocation4], %s357
          %s359 = sand.u32 %s116, 1
          %s360 = smul.addr %s359, 16
          %s361 = scalar_lea.vmem [#allocation5], %s360
          %363 = dma.done %s358, 256
        $region48: #{tpu_custom_call.1} parent=43 // pred_fallthru
          _
      $region44: #{tpu_custom_call.1} parent=5 // pred_fallthru
        _
    $region6: #{tpu_custom_call.1} parent=1 // loop_footer
      %s17 = sadd.s32 1, %s13
    $region7: #{tpu_custom_call.1} parent=1 // loop_footer_branch
      %12 = sbr.rel target = $region3
    $region8: #{tpu_custom_call.1} parent=1 // loop_exit
      _
    %364 = vsyncpa [#allocation3], 1
    %s365 = scalar_lea.sflag [#allocation3], 1
    %366 = vsyncpa %s365, 1
    %367 = vsyncpa [#allocation4], 1
    %s368 = scalar_lea.sflag [#allocation4], 1
    %369 = vsyncpa %s368, 1

</llo_original>
